<compile_context>
chip_gen: v6e
topology: v6e:2x2x1
jax: 0.10.0
libtpu: 0.0.40
codegen_flags: <defaults>
</compile_context>

<pallas_src>
import jax
import jax.numpy as jnp
from jax.experimental import pallas as pl
from jax.experimental.pallas import tpu as pltpu


# ---------------- GQA head-count logic (port of the PyTorch helpers) ----------------

def _get_number_of_extra_heads(num_heads: int, tp_degree: int) -> int:
    if num_heads % tp_degree == 0:
        return 0
    return tp_degree - (num_heads % tp_degree)


def determine_sharding_strategy(tp_degree, source_kv_heads, desired=None):
    strategy = desired if desired is not None else "replicate-to-tp-degree"
    if strategy == "replicate-to-tp-degree" and tp_degree % source_kv_heads != 0:
        strategy = "convert-to-mha"
    return strategy


def get_shardable_head_counts(tp_degree, num_attention_heads, num_key_value_heads, strategy):
    upd_q = num_attention_heads + _get_number_of_extra_heads(num_attention_heads, tp_degree)
    upd_kv = num_key_value_heads
    if num_attention_heads == num_key_value_heads:
        upd_kv = upd_q
    elif num_key_value_heads < tp_degree or num_key_value_heads % tp_degree != 0:
        if strategy == "replicate-to-tp-degree":
            assert tp_degree % num_key_value_heads == 0
            upd_kv = tp_degree
        elif strategy == "convert-to-mha":
            upd_kv = upd_q
    return upd_q, upd_kv


def _round_up(x: int, m: int) -> int:
    return ((x + m - 1) // m) * m


def _cdiv(a: int, b: int) -> int:
    return -(-a // b)


# ---------------- Tile selection helpers ----------------

_DEFAULT_TILE_BUDGET = 32 * 1024 * 1024   # working-set target, safe on v5e/v6e/v7x


def _divisor_tiles(dim_p: int):
    """All divisors of dim_p that are multiples of 128, descending. dim_p % 128 == 0."""
    q = dim_p // 128
    return [128 * d for d in range(q, 0, -1) if q % d == 0]


def _budget_bytes(tm, tk, tn, in_isz, out_isz, with_acc):
    # double-buffered inputs (x tile, w tile, bias row) + double-buffered output tile
    b = 2 * (tm * tk + tk * tn + tn) * in_isz
    b += 2 * tm * tn * out_isz
    if with_acc:
        b += tm * tn * 4                  # f32 accumulator scratch (single copy)
    return b


def _pick_tn(Np, max_tn, force_split):
    limit = max_tn
    if force_split and Np >= 256:
        limit = min(limit, Np // 2)       # guarantee grid_n >= 2 (v7x: both TCs busy)
    for t in _divisor_tiles(Np):
        if t <= limit:
            return t
    return 128


def _pick_tk(Kp, tm, tn, in_isz, out_isz, budget):
    # Prefer collapsing the reduction: single pass, no accumulator scratch.
    if _budget_bytes(tm, Kp, tn, in_isz, out_isz, with_acc=False) <= budget:
        return Kp
    for t in _divisor_tiles(Kp):
        if t < Kp and _budget_bytes(tm, t, tn, in_isz, out_isz, with_acc=True) <= budget:
            return t
    return 128


# ---------------- Pallas kernels ----------------

def _oproj_kernel_fused_k(x_ref, wt_ref, b_ref, o_ref):
    # grid = (Mp//tm, Np//tn); the whole K dim is in VMEM -> no accumulator round-trip.
    acc = jnp.dot(x_ref[...], wt_ref[...], preferred_element_type=jnp.float32)
    o_ref[...] = (acc + b_ref[...].astype(jnp.float32)).astype(o_ref.dtype)


def _oproj_kernel_reduce_k(x_ref, wt_ref, b_ref, o_ref, acc_ref):
    # grid = (Mp//tm, Np//tn, Kp//tk); K is the last ("arbitrary") reduction axis.
    @pl.when(pl.program_id(2) == 0)
    def _():
        acc_ref[...] = jnp.zeros_like(acc_ref)

    acc_ref[...] += jnp.dot(x_ref[...], wt_ref[...], preferred_element_type=jnp.float32)

    @pl.when(pl.program_id(2) == pl.num_programs(2) - 1)
    def _():
        o_ref[...] = (acc_ref[...] + b_ref[...].astype(jnp.float32)).astype(o_ref.dtype)


def oproj_matmul_padded(x_pad, wt_pad, bias_pad, *, tm, tk, tn, out_dtype):
    """x_pad: (Mp, Kp); wt_pad: (Kp, Np); bias_pad: (1, Np) -> (Mp, Np).

    Mp % tm == 0, Np % tn == 0, Kp % tk == 0.  If tk == Kp the reduction axis is dropped.
    """
    Mp, Kp = x_pad.shape
    Kp2, Np = wt_pad.shape
    assert Kp == Kp2
    assert Mp % tm == 0 and Np % tn == 0 and Kp % tk == 0

    in_isz = x_pad.dtype.itemsize
    out_isz = jnp.dtype(out_dtype).itemsize
    single_pass = (tk == Kp)

    needed = _budget_bytes(tm, tk, tn, in_isz, out_isz, with_acc=not single_pass)
    vmem_limit = max(32 * 1024 * 1024, min(needed + 8 * 1024 * 1024, 64 * 1024 * 1024))

    cost = pl.CostEstimate(
        flops=2 * Mp * Np * Kp,
        transcendentals=0,
        bytes_accessed=int(Mp * Kp * in_isz + Kp * Np * wt_pad.dtype.itemsize
                           + Mp * Np * out_isz),
    )

    if single_pass:
        grid = (Mp // tm, Np // tn)
        return pl.pallas_call(
            _oproj_kernel_fused_k,
            out_shape=jax.ShapeDtypeStruct((Mp, Np), out_dtype),
            grid_spec=pltpu.PrefetchScalarGridSpec(
                num_scalar_prefetch=0,
                grid=grid,
                in_specs=[
                    pl.BlockSpec((tm, Kp), lambda i, j: (i, 0)),
                    pl.BlockSpec((Kp, tn), lambda i, j: (0, j)),
                    pl.BlockSpec((1, tn), lambda i, j: (0, j)),
                ],
                out_specs=pl.BlockSpec((tm, tn), lambda i, j: (i, j)),
            ),
            compiler_params=pltpu.CompilerParams(
                dimension_semantics=("parallel", "parallel"),
                vmem_limit_bytes=vmem_limit,
            ),
            cost_estimate=cost,
        )(x_pad, wt_pad, bias_pad)

    grid = (Mp // tm, Np // tn, Kp // tk)
    return pl.pallas_call(
        _oproj_kernel_reduce_k,
        out_shape=jax.ShapeDtypeStruct((Mp, Np), out_dtype),
        grid_spec=pltpu.PrefetchScalarGridSpec(
            num_scalar_prefetch=0,
            grid=grid,
            in_specs=[
                pl.BlockSpec((tm, tk), lambda i, j, k: (i, k)),
                pl.BlockSpec((tk, tn), lambda i, j, k: (k, j)),
                pl.BlockSpec((1, tn), lambda i, j, k: (0, j)),
            ],
            out_specs=pl.BlockSpec((tm, tn), lambda i, j, k: (i, j)),
            scratch_shapes=[pltpu.VMEM((tm, tn), jnp.float32)],
        ),
        compiler_params=pltpu.CompilerParams(
            dimension_semantics=("parallel", "parallel", "arbitrary"),
            vmem_limit_bytes=vmem_limit,
        ),
        cost_estimate=cost,
    )(x_pad, wt_pad, bias_pad)


# ---------------- Module wrapper ----------------

class GroupQueryAttentionO:
    """JAX/Pallas port of GroupQueryAttention_O (tp_degree=1, no process group ->
    o_proj is a plain Linear(num_attention_heads*head_dim -> hidden_size, bias=bias))."""

    # TODO(synk): RowParallelLinear all-reduce across tensor-parallel ranks (tp_degree>1)
    # and the preshard_hook checkpoint re-layout are host/collective-side and not ported;
    # only the tp_degree=1 forward path is implemented.

    def __init__(self, hidden_size, head_dim, num_attention_heads, num_key_value_heads,
                 tp_degree=1, dtype=jnp.float32, bias=False, key=None,
                 compute_dtype=None, max_tm=512, max_tn=512,
                 vmem_tile_budget=_DEFAULT_TILE_BUDGET):
        self.hidden_size = hidden_size
        self.head_dim = head_dim
        self.tp_degree = tp_degree
        self.dtype = dtype
        self.bias = bias

        self.sharding_strategy = determine_sharding_strategy(tp_degree, num_key_value_heads)
        self.num_attention_heads, self.num_key_value_heads = get_shardable_head_counts(
            tp_degree, num_attention_heads, num_key_value_heads, self.sharding_strategy
        )

        in_features = self.num_attention_heads * self.head_dim
        out_features = self.hidden_size
        self.in_features = in_features
        self.out_features = out_features

        if key is None:
            key = jax.random.PRNGKey(0)
        wkey, bkey = jax.random.split(key)
        # Deterministic init mirroring nn.Linear's uniform(-1/sqrt(in), 1/sqrt(in)).
        bound = 1.0 / (in_features ** 0.5)
        # PyTorch weight layout: (out, in). Kept only for reference checks; in production
        # drop it after building weight_t_padded (halves the layer's HBM footprint).
        self.weight = jax.random.uniform(
            wkey, (out_features, in_features), dtype=jnp.float32,
            minval=-bound, maxval=bound
        ).astype(dtype)
        self.bias_param = None
        if bias:
            self.bias_param = jax.random.uniform(
                bkey, (out_features,), dtype=jnp.float32, minval=-bound, maxval=bound
            ).astype(dtype)

        # ---- compute dtype / tile bookkeeping ----
        self._compute_dtype = jnp.dtype(compute_dtype if compute_dtype is not None else dtype)
        itemsize = self._compute_dtype.itemsize
        self._sublane = 8 * max(1, 4 // itemsize)        # 8 for f32, 16 for bf16
        self._max_tm = max_tm
        self._max_tn = max_tn
        self._budget = vmem_tile_budget

        # Pad only to the 128 lane grid (never to a capped tile) -> minimal waste.
        self._Kp = _round_up(in_features, 128)
        self._Np = _round_up(out_features, 128)

        # ---- Pre-transpose + pre-pad the weight ONCE (no per-call transpose) ----
        wt = jnp.pad(self.weight.T.astype(self._compute_dtype),
                     ((0, self._Kp - in_features), (0, self._Np - out_features)))
        self.weight_t_padded = wt

        b_pad = jnp.zeros((1, self._Np), dtype=self._compute_dtype)
        if self.bias_param is not None:
            b_pad = b_pad.at[0, :out_features].set(self.bias_param.astype(self._compute_dtype))
        self.bias_padded = b_pad

    def __call__(self, attention_output):
        # attention_output: [batch, seq, num_attention_heads * head_dim]
        B, S, K = attention_output.shape
        assert K == self.in_features
        N = self.out_features
        M = B * S
        Kp, Np = self._Kp, self._Np
        out_dtype = attention_output.dtype

        # tm: minimal-padding choice — split M into cdiv(M, max_tm) roughly equal,
        # sublane-aligned blocks (M=576 -> tm=288, Mp=576; not tm=512, Mp=1024).
        n_mblocks = max(1, _cdiv(M, self._max_tm))
        tm = _round_up(_cdiv(M, n_mblocks), self._sublane)
        Mp = _round_up(M, tm)
        grid_m = Mp // tm

        # tn: largest 128-multiple dividing Np; force >=2 N-blocks on decode-shaped
        # calls (grid_m == 1) so both v7x TensorCores get work.
        tn = _pick_tn(Np, self._max_tn, force_split=(grid_m == 1))

        # tk: whole K if it fits the VMEM tile budget (single-pass, no accumulator),
        # else the largest 128-multiple divisor of Kp fitting the budget.
        in_isz = self._compute_dtype.itemsize
        out_isz = jnp.dtype(out_dtype).itemsize
        tk = _pick_tk(Kp, tm, tn, in_isz, out_isz, self._budget)

        x2d = attention_output.reshape(M, K)
        if x2d.dtype != self._compute_dtype:
            x2d = x2d.astype(self._compute_dtype)

        pad_m, pad_k = Mp - M, Kp - K
        if pad_m or pad_k:
            # K-padding must be zero (reduction axis); M-padding rows are discarded.
            x2d = jnp.pad(x2d, ((0, pad_m), (0, pad_k)))

        y_pad = oproj_matmul_padded(
            x2d, self.weight_t_padded, self.bias_padded,
            tm=tm, tk=tk, tn=tn, out_dtype=out_dtype,
        )
        y2d = y_pad if (Mp == M and Np == N) else y_pad[:M, :N]
        return y2d.reshape(B, S, N)


if __name__ == "__main__":
    key = jax.random.PRNGKey(0)
    k_mod, k_x, k_mod2, k_x2, k_mod3, k_x3 = jax.random.split(key, 6)

    # ---- Test 1: small shapes, GQA 4 q-heads / 2 kv-heads, head_dim=8, no bias ----
    batch, seq = 2, 8
    hidden_size, head_dim = 32, 8
    mod = GroupQueryAttentionO(
        hidden_size=hidden_size, head_dim=head_dim,
        num_attention_heads=4, num_key_value_heads=2,
        tp_degree=1, dtype=jnp.float32, bias=False, key=k_mod,
    )
    attention_output = jax.random.normal(
        k_x, (batch, seq, mod.num_attention_heads * head_dim), dtype=jnp.float32
    )
    out = jax.block_until_ready(mod(attention_output))
    with jax.default_matmul_precision("highest"):
        ref = attention_output.reshape(batch * seq, -1) @ mod.weight.T
    ref = ref.reshape(batch, seq, hidden_size)
    assert out.shape == (batch, seq, hidden_size)
    assert jnp.allclose(out, ref, atol=1e-5, rtol=1e-5)

    # ---- Test 2: medium shapes exercising minimal-padding tm (576 -> 2x288),
    # divisor-based tn/tk, single-pass K and fused bias ----
    batch2, seq2 = 4, 144                 # M = 576 -> tm=288, Mp=576 (no M padding)
    hidden_size2, head_dim2 = 384, 80     # K = 640 = Kp (single-pass), N = 384 (tn=384)
    mod2 = GroupQueryAttentionO(
        hidden_size=hidden_size2, head_dim=head_dim2,
        num_attention_heads=8, num_key_value_heads=8,
        tp_degree=1, dtype=jnp.float32, bias=True, key=k_mod2,
    )
    x2 = jax.random.normal(
        k_x2, (batch2, seq2, mod2.num_attention_heads * head_dim2), dtype=jnp.float32
    )
    out2 = jax.block_until_ready(mod2(x2))
    with jax.default_matmul_precision("highest"):
        ref2 = x2.reshape(batch2 * seq2, -1) @ mod2.weight.T + mod2.bias_param[None, :]
    ref2 = ref2.reshape(batch2, seq2, hidden_size2)
    assert out2.shape == (batch2, seq2, hidden_size2)
    assert jnp.allclose(out2, ref2, atol=2e-4, rtol=2e-4)

    # ---- Test 3: decode-shaped call (tiny M) -> grid_m == 1, tn split so grid_n >= 2 ----
    batch3, seq3 = 1, 4                   # M = 4 -> tm=8, Mp=8
    hidden_size3, head_dim3 = 1280, 64    # N = 1280 -> Np=1280, tn <= 640; K = 640
    mod3 = GroupQueryAttentionO(
        hidden_size=hidden_size3, head_dim=head_dim3,
        num_attention_heads=10, num_key_value_heads=10,
        tp_degree=1, dtype=jnp.float32, bias=True, key=k_mod3,
    )
    x3 = jax.random.normal(
        k_x3, (batch3, seq3, mod3.num_attention_heads * head_dim3), dtype=jnp.float32
    )
    out3 = jax.block_until_ready(mod3(x3))
    with jax.default_matmul_precision("highest"):
        ref3 = x3.reshape(batch3 * seq3, -1) @ mod3.weight.T + mod3.bias_param[None, :]
    ref3 = ref3.reshape(batch3, seq3, hidden_size3)
    assert out3.shape == (batch3, seq3, hidden_size3)
    assert jnp.allclose(out3, ref3, atol=2e-4, rtol=2e-4)

    print("KERNEL_OK")
</pallas_src>

<mosaic_0001>
module attributes {stable_mosaic.version = 11 : i64} {
  func.func @_oproj_kernel_fused_k(%arg0: i32, %arg1: i32, %arg2: memref<16x128xf32, #tpu.memory_space<vmem>>, %arg3: memref<128x128xf32, #tpu.memory_space<vmem>>, %arg4: memref<1x128xf32, #tpu.memory_space<vmem>>, %arg5: memref<16x128xf32, #tpu.memory_space<vmem>>) attributes {dimension_semantics = [#tpu.dimension_semantics<parallel>, #tpu.dimension_semantics<parallel>], iteration_bounds = array<i64: 1, 1>, scalar_prefetch = 0 : i64, scratch_operands = 0 : i64, tpu.core_type = #tpu.core_type<tc>, window_params = [{transform_indices = @transform_0, window_bounds = array<i64: 16, 128>}, {transform_indices = @transform_1, window_bounds = array<i64: 128, 128>}, {transform_indices = @transform_2, window_bounds = array<i64: 1, 128>}, {transform_indices = @transform_3, window_bounds = array<i64: 16, 128>}]} {
    %c0 = arith.constant 0 : index
    %c0_0 = arith.constant 0 : index
    %0 = vector.load %arg2[%c0, %c0_0] : memref<16x128xf32, #tpu.memory_space<vmem>>, vector<16x128xf32>
    %c0_1 = arith.constant 0 : index
    %c0_2 = arith.constant 0 : index
    %1 = vector.load %arg3[%c0_1, %c0_2] : memref<128x128xf32, #tpu.memory_space<vmem>>, vector<128x128xf32>
    %cst = arith.constant dense<0.000000e+00> : vector<16x128xf32>
    %2 = tpu.matmul %0, %1, %cst {dimension_numbers = #tpu.dot_dimension_numbers<[1], [0], [0], [1], [0, 0, 1, 1], [], []>} : vector<16x128xf32>, vector<128x128xf32>, vector<16x128xf32> -> vector<16x128xf32>
    %c0_3 = arith.constant 0 : index
    %c0_4 = arith.constant 0 : index
    %3 = vector.load %arg4[%c0_3, %c0_4] : memref<1x128xf32, #tpu.memory_space<vmem>>, vector<1x128xf32>
    %4 = vector.broadcast %3 : vector<1x128xf32> to vector<16x128xf32>
    %5 = arith.addf %2, %4 : vector<16x128xf32>
    %c0_5 = arith.constant 0 : index
    %c0_6 = arith.constant 0 : index
    %6 = vector.load %arg5[%c0_5, %c0_6] : memref<16x128xf32, #tpu.memory_space<vmem>>, vector<16x128xf32>
    tpu.vector_store %arg5[%c0_5, %c0_6], %5 {strides = array<i32>} : memref<16x128xf32, #tpu.memory_space<vmem>>, vector<16x128xf32>,
    return
  }
  func.func @transform_0(%arg0: i32, %arg1: i32) -> (i32, i32) {
    %c0_i32 = arith.constant 0 : i32
    %c0_i32_0 = arith.constant 0 : i32
    return %arg0, %c0_i32 : i32, i32
  }
  func.func @transform_1(%arg0: i32, %arg1: i32) -> (i32, i32) {
    %c0_i32 = arith.constant 0 : i32
    %c0_i32_0 = arith.constant 0 : i32
    return %c0_i32, %arg1 : i32, i32
  }
  func.func @transform_2(%arg0: i32, %arg1: i32) -> (i32, i32) {
    %c0_i32 = arith.constant 0 : i32
    %c0_i32_0 = arith.constant 0 : i32
    return %c0_i32, %arg1 : i32, i32
  }
  func.func @transform_3(%arg0: i32, %arg1: i32) -> (i32, i32) {
    %c0_i32 = arith.constant 0 : i32
    return %arg0, %arg1 : i32, i32
  }
}

</mosaic_0001>

<llo_original>
// kernel: tpu_custom_call.1
$region0: #{tpu_custom_call.1}
  #allocation0 [shape = 'u32[]', space=smem, size = 0x4, offset = 0x4, fixed_abs, tag = 'smem constant byte address 0x4 - core index']
  #allocation1 [shape = 'u32[144,128]{1,0:T(1,128)}', space=vmem, size = 0x12000, scoped, tag = 'internal scratch']
  %s0 = inlined_call_operand.hbm [shape: f32[16,128], index: 0, kind: input, shape index: {}]
  %s1 = inlined_call_operand.hbm [shape: f32[128,128], index: 1, kind: input, shape index: {}]
  %s2 = inlined_call_operand.vmem [shape: f32[1,128], index: 2, kind: input, shape index: {}]
  %s3 = inlined_call_operand.hbm [shape: f32[16,128], index: 3, kind: output, shape index: {}]
  %s4 = sld [smem:[#allocation0]]
  $region30: #{tpu_custom_call.1} parent=0
    _
  %s6 = ssub.s32 1, %s4
  %s7 = scalar_select 0, %s6, %s4
  $region1: #{tpu_custom_call.1} parent=0
    #allocation2 [shape = 'u8[8192]{0}', space=vmem, size = 0x2000, scoped, tag = 'input window, operand 0, single buffered']
    #allocation3 [shape = 's32[1]{0}', space=sflag, size = 0x4, scoped, tag = 'scoped memory for tpu_custom_call.1']
    #allocation4 [shape = 's32[1]{0}', space=sflag, size = 0x4, scoped, tag = 'scoped memory for tpu_custom_call.1']
    #allocation5 [shape = 'u8[65536]{0}', space=vmem, size = 0x10000, scoped, tag = 'input window, operand 1, single buffered']
    #allocation6 [shape = 's32[1]{0}', space=sflag, size = 0x4, scoped, tag = 'scoped memory for tpu_custom_call.1']
    #allocation7 [shape = 'u8[8192]{0}', space=vmem, size = 0x2000, scoped, tag = 'output window, operand 0, single buffered']
    %8 = vsyncpa [#allocation3], 0
    %9 = vsyncpa [#allocation6], 0
    %10 = vsyncpa [#allocation4], 0
    // Predicated region
    $region2: #{tpu_custom_call.1} parent=1 // pred_check
      _
    $region3: #{tpu_custom_call.1} parent=1 // pred_check_branch
      %12 = sbr.rel (0) target = $region5
    $region4: #{tpu_custom_call.1} parent=1 // pred_region
      %s14 = ssub.s32 256, 256
      %15 = vsyncadd [#allocation3], %s14
      %s16 = sshll.u32 [#allocation2], 4
      %s17 = int_to_ptr.vmem [resolvable:$true] %s16
      %22 = dma.hbm_to_vmem [thread:$0]  %s0, 256, %s17, [#allocation3], 128, 128, 8
    $region5: #{tpu_custom_call.1} parent=1 // pred_fallthru
      _
    // Predicated region
    $region6: #{tpu_custom_call.1} parent=1 // pred_check
      _
    $region7: #{tpu_custom_call.1} parent=1 // pred_check_branch
      %24 = sbr.rel (0) target = $region9
    $region8: #{tpu_custom_call.1} parent=1 // pred_region
      %s26 = ssub.s32 2048, 2048
      %27 = vsyncadd [#allocation6], %s26
      %s28 = sshll.u32 [#allocation5], 4
      %s29 = int_to_ptr.vmem [resolvable:$true] %s28
      %34 = dma.hbm_to_vmem [thread:$0]  %s1, 2048, %s29, [#allocation6], 128, 128, 8
    $region9: #{tpu_custom_call.1} parent=1 // pred_fallthru
      _
    // Predicated region
    $region10: #{tpu_custom_call.1} parent=1 // pred_check
      _
    $region11: #{tpu_custom_call.1} parent=1 // pred_check_branch
      %36 = sbr.rel (0) target = $region13
    $region12: #{tpu_custom_call.1} parent=1 // pred_region
      _
    $region13: #{tpu_custom_call.1} parent=1 // pred_fallthru
      _
    // Predicated region
    $region14: #{tpu_custom_call.1} parent=1 // pred_check
      _
    $region15: #{tpu_custom_call.1} parent=1 // pred_check_branch
      %38 = sbr.rel (0) target = $region17
    $region16: #{tpu_custom_call.1} parent=1 // pred_region
      %39 = dma.done [#allocation3], 256
    $region17: #{tpu_custom_call.1} parent=1 // pred_fallthru
      _
    // Predicated region
    $region18: #{tpu_custom_call.1} parent=1 // pred_check
      _
    $region19: #{tpu_custom_call.1} parent=1 // pred_check_branch
      %41 = sbr.rel (0) target = $region21
    $region20: #{tpu_custom_call.1} parent=1 // pred_region
      %42 = dma.done [#allocation6], 2048
    $region21: #{tpu_custom_call.1} parent=1 // pred_fallthru
      _
    %v43 = vld [vmem:[#allocation2] sm:$0xff]
    %v44 = vld [vmem:[#allocation2 + $0x8] sm:$0xff]
    %v45 = vld [vmem:[#allocation5] sm:$0xff]
    %v46 = vld [vmem:[#allocation5 + $0x8] sm:$0xff]
    %v47 = vld [vmem:[#allocation5 + $0x10] sm:$0xff]
    %v48 = vld [vmem:[#allocation5 + $0x18] sm:$0xff]
    %v49 = vld [vmem:[#allocation5 + $0x20] sm:$0xff]
    %v50 = vld [vmem:[#allocation5 + $0x28] sm:$0xff]
    %v51 = vld [vmem:[#allocation5 + $0x30] sm:$0xff]
    %v52 = vld [vmem:[#allocation5 + $0x38] sm:$0xff]
    %v53 = vld [vmem:[#allocation5 + $0x40] sm:$0xff]
    %v54 = vld [vmem:[#allocation5 + $0x48] sm:$0xff]
    %v55 = vld [vmem:[#allocation5 + $0x50] sm:$0xff]
    %v56 = vld [vmem:[#allocation5 + $0x58] sm:$0xff]
    %v57 = vld [vmem:[#allocation5 + $0x60] sm:$0xff]
    %v58 = vld [vmem:[#allocation5 + $0x68] sm:$0xff]
    %v59 = vld [vmem:[#allocation5 + $0x70] sm:$0xff]
    %v60 = vld [vmem:[#allocation5 + $0x78] sm:$0xff]
    %v61 = vld [vmem:[%s2] sm:$0x1]
    %v63 = vlaneseq
    %v64 = vshrl.u32 %v63, 7
    %v65 = vsub.s32 0, %v64
    %v66 = vrot.slane %v61, %v65
    %68 = vmatprep.subr.mxu0 0.0
    %69 = vmatpush1.msra.mxu0 %v60
    %70 = vmatprep.subr.mxu0 0.0
    %71 = vmatpush1.msra.mxu0 %v59
    %72 = vmatprep.subr.mxu0 0.0
    %73 = vmatpush1.msra.mxu0 %v58
    %74 = vmatprep.subr.mxu0 0.0
    %75 = vmatpush1.msra.mxu0 %v57
    %76 = vmatprep.subr.mxu0 0.0
    %77 = vmatpush1.msra.mxu0 %v56
    %78 = vmatprep.subr.mxu0 0.0
    %79 = vmatpush1.msra.mxu0 %v55
    %80 = vmatprep.subr.mxu0 0.0
    %81 = vmatpush1.msra.mxu0 %v54
    %82 = vmatprep.subr.mxu0 0.0
    %83 = vmatpush1.msra.mxu0 %v53
    %84 = vmatprep.subr.mxu0 0.0
    %85 = vmatpush1.msra.mxu0 %v52
    %86 = vmatprep.subr.mxu0 0.0
    %87 = vmatpush1.msra.mxu0 %v51
    %88 = vmatprep.subr.mxu0 0.0
    %89 = vmatpush1.msra.mxu0 %v50
    %90 = vmatprep.subr.mxu0 0.0
    %91 = vmatpush1.msra.mxu0 %v49
    %92 = vmatprep.subr.mxu0 0.0
    %93 = vmatpush1.msra.mxu0 %v48
    %94 = vmatprep.subr.mxu0 0.0
    %95 = vmatpush1.msra.mxu0 %v47
    %96 = vmatprep.subr.mxu0 0.0
    %97 = vmatpush1.msra.mxu0 %v46
    %98 = vmatprep.subr.mxu0 0.0
    %99 = vmatpush1.msra.mxu0 %v45
    %100 = vmatprep.subr.mxu0 0.0
    %101 = vmatpush2.msra.mxu0 0.0
    %102 = vmatprep.subr.mxu0 0.0
    %103 = vmatpush2.msra.mxu0 0.0
    %104 = vmatprep.subr.mxu0 0.0
    %105 = vmatpush2.msra.mxu0 0.0
    %106 = vmatprep.subr.mxu0 0.0
    %107 = vmatpush2.msra.mxu0 0.0
    %108 = vmatprep.subr.mxu0 0.0
    %109 = vmatpush2.msra.mxu0 0.0
    %110 = vmatprep.subr.mxu0 0.0
    %111 = vmatpush2.msra.mxu0 0.0
    %112 = vmatprep.subr.mxu0 0.0
    %113 = vmatpush2.msra.mxu0 0.0
    %114 = vmatprep.subr.mxu0 0.0
    %115 = vmatpush2.msra.mxu0 0.0
    %116 = vmatprep.subr.mxu0 0.0
    %117 = vmatpush2.msra.mxu0 0.0
    %118 = vmatprep.subr.mxu0 0.0
    %119 = vmatpush2.msra.mxu0 0.0
    %120 = vmatprep.subr.mxu0 0.0
    %121 = vmatpush2.msra.mxu0 0.0
    %122 = vmatprep.subr.mxu0 0.0
    %123 = vmatpush2.msra.mxu0 0.0
    %124 = vmatprep.subr.mxu0 0.0
    %125 = vmatpush2.msra.mxu0 0.0
    %126 = vmatprep.subr.mxu0 0.0
    %127 = vmatpush2.msra.mxu0 0.0
    %128 = vmatprep.subr.mxu0 0.0
    %129 = vmatpush2.msra.mxu0 0.0
    %130 = vmatprep.subr.mxu0 0.0
    %131 = vmatpush2.msra.mxu0 0.0
    %132 = vmatprep.mubr.f32.mxu0 0.0
    %133 = vmatmul.mubr.f32.gmra.mxu0 %v43
    %v134 = vpop.f32.mrf.mxu0
    %v135 = vadd.f32 %v66, %v134
    %v136 = vpop.f32.mrf.mxu0
    %137 = vmatprep.mubr.f32.mxu0 0.0
    %138 = vmatmul.mubr.f32.gmra.mxu0 %v44
    %v139 = vpop.f32.mrf.mxu0
    %v140 = vadd.f32 %v66, %v139
    %v141 = vpop.f32.mrf.mxu0
    %142 = vdwg.mxu0
    %143 = vst [vmem:[#allocation7] sm:$0xff] %v135
    %144 = vst [vmem:[#allocation7 + $0x8] sm:$0xff] %v140
    // Predicated region
    $region22: #{tpu_custom_call.1} parent=1 // pred_check
      _
    $region23: #{tpu_custom_call.1} parent=1 // pred_check_branch
      %146 = sbr.rel (0) target = $region25
    $region24: #{tpu_custom_call.1} parent=1 // pred_region
      %s148 = ssub.s32 256, 256
      %149 = vsyncadd [#allocation4], %s148
      %s150 = sshll.u32 [#allocation7], 4
      %s151 = int_to_ptr.vmem [resolvable:$true] %s150
      %156 = dma.vmem_to_hbm [thread:$0]  %s151, 256, %s3, [#allocation4], 128, 128, 8
    $region25: #{tpu_custom_call.1} parent=1 // pred_fallthru
      _
    // Predicated region
    $region26: #{tpu_custom_call.1} parent=1 // pred_check
      _
    $region27: #{tpu_custom_call.1} parent=1 // pred_check_branch
      %158 = sbr.rel (0) target = $region29
    $region28: #{tpu_custom_call.1} parent=1 // pred_region
      %159 = dma.done [#allocation4], 256
    $region29: #{tpu_custom_call.1} parent=1 // pred_fallthru
      _
    %160 = vsyncpa [#allocation3], 1
    %161 = vsyncpa [#allocation6], 1
    %162 = vsyncpa [#allocation4], 1

</llo_original>
